<compile_context>
chip_gen: v7x
topology: tpu7x:2x2x1
jax: 0.10.0
libtpu: 0.0.40
codegen_flags: <defaults>
</compile_context>

<pallas_src>
import functools
import math

import jax
import jax.numpy as jnp
from jax.experimental import pallas as pl
from jax.experimental.pallas import tpu as pltpu


def _label_smoothing_kernel(x_ref, tgt_ref, out_ref, *,
                            n, v, v_tile, num_v_tiles, padding_idx,
                            eps, confidence, row_const):
    i = pl.program_id(0)                       # row-tile index
    j = pl.program_id(1)                       # vocab-tile index (always 0 if V untiled)

    x = x_ref[...].astype(jnp.float32)         # (TN, TV); upcast after the (native-dtype) load
    tgt = tgt_ref[...]                         # (TN, 1) int32
    tn, tv = x.shape

    col = jax.lax.broadcasted_iota(jnp.int32, (tn, tv), 1)   # local column ids

    # Zero out-of-range vocab columns of the ragged last V tile (static check).
    if v % v_tile != 0:
        x = jnp.where(col < (v - j * v_tile), x, 0.0)

    # x[:, target] per row (zero if the target column is not in this V tile).
    tgt_local = tgt - j * v_tile if num_v_tiles > 1 else tgt
    x_tgt = jnp.sum(jnp.where(col == tgt_local, x, 0.0), axis=-1, keepdims=True)

    row_loss = jnp.zeros((tn, 1), jnp.float32)
    if eps > 0.0:
        rowsum = jnp.sum(x, axis=-1, keepdims=True)
        # x[:, padding_idx]: static in-tile column slice, only counted on the
        # vocab tile that actually contains padding_idx.
        pad_j = padding_idx // v_tile
        pad_local = padding_idx % v_tile
        x_pad = x[:, pad_local:pad_local + 1]
        if num_v_tiles > 1:
            x_pad = jnp.where(j == pad_j, x_pad, 0.0)
        row_loss = row_loss - eps * (rowsum - x_pad - x_tgt)
    if confidence > 0.0:
        row_loss = row_loss - confidence * x_tgt

    # Per-row constant sum_{td>0} td*log(td) (compile-time), added once per row
    # (on the first vocab tile).
    if num_v_tiles > 1:
        row_loss = row_loss + jnp.where(j == 0, row_const, 0.0)
    else:
        row_loss = row_loss + row_const

    # Row validity: rows past N (tail row tile reads garbage) and rows whose
    # target is padding_idx contribute exactly zero. Selects discard any
    # garbage-derived values (no NaN propagation across rows).
    valid = tgt != padding_idx
    if n % tn != 0:
        row_id = jax.lax.broadcasted_iota(jnp.int32, (tn, 1), 0) + i * tn
        valid = valid & (row_id < n)
    s = jnp.sum(jnp.where(valid, row_loss, 0.0))

    # Emit the partial at [0,0] of this row tile's lane-dense (8,128) slab,
    # accumulating over the (resident) output block across vocab tiles.
    r = jax.lax.broadcasted_iota(jnp.int32, (8, 128), 0)
    c = jax.lax.broadcasted_iota(jnp.int32, (8, 128), 1)
    slab = jnp.where((r == 0) & (c == 0), s, 0.0)

    if num_v_tiles == 1:
        out_ref[...] = slab
    else:
        @pl.when(j == 0)
        def _():
            out_ref[...] = slab

        @pl.when(j > 0)
        def _():
            out_ref[...] = out_ref[...] + slab


def label_smoothing_loss(x, target, *, size, padding_idx, smoothing,
                         row_tile=None, v_tile=None, vmem_limit_bytes=None):
    """x: (N, size) log-probs (f32 / bf16 / f16); target: (N,) int. Scalar f32 loss."""
    n, v = x.shape
    assert v == size
    assert size > 2, "smoothing/(size-2) requires size > 2 (matches PyTorch module)"
    assert 0 <= padding_idx < size

    if x.dtype not in (jnp.float32, jnp.bfloat16, jnp.float16):
        x = x.astype(jnp.float32)              # other dtypes -> f32; low-precision streamed as-is
    tgt2d = target.astype(jnp.int32).reshape(n, 1)

    itemsize = x.dtype.itemsize
    sub = {4: 8, 2: 16, 1: 32}.get(itemsize, 8)   # sublane-packing multiple for this dtype

    # Generation-aware VMEM budget: one x buffer <= vmem/8 (double-buffered -> vmem/4).
    try:
        vmem_cap = int(pltpu.get_tpu_info().vmem_capacity_bytes)
    except Exception:
        vmem_cap = 64 * 1024 * 1024            # conservative fallback (v7x per-TC)
    x_buf_budget = vmem_cap // 8

    # Vocab tiling only when even a `sub`-row slab of the full vocab blows the budget.
    if v_tile is None:
        if sub * v * itemsize <= x_buf_budget:
            v_tile = v
        else:
            v_tile = max(128, (x_buf_budget // (sub * itemsize)) // 128 * 128)
    v_tile = int(v_tile)
    if v_tile >= v:
        v_tile = v
    else:
        v_tile = max(128, (v_tile // 128) * 128)   # (8,128) rule: multiple of 128 unless full-V
        if v_tile >= v:
            v_tile = v
    num_v_tiles = pl.cdiv(v, v_tile)

    # Row tile: fill the per-buffer byte budget; keep >= 2 row tiles when N allows
    # (v7x megacore); round to the dtype's sublane multiple. No wrapper-side
    # padding: the kernel masks the ragged tail rows.
    n_ceil = ((n + sub - 1) // sub) * sub
    if row_tile is None:
        row_tile = (x_buf_budget // (v_tile * itemsize)) // sub * sub
    row_tile = max(sub, (int(row_tile) // sub) * sub)
    if n > sub:
        half = ((pl.cdiv(n, 2) + sub - 1) // sub) * sub
        row_tile = min(row_tile, half)
    row_tile = min(row_tile, n_ceil)
    num_row_tiles = pl.cdiv(n, row_tile)

    eps = float(smoothing) / (size - 2)
    confidence = 1.0 - float(smoothing)
    row_const = 0.0                             # sum_{td>0} td*log(td) per valid row
    if eps > 0.0:
        row_const += eps * (size - 2) * math.log(eps)
    if confidence > 0.0:
        row_const += confidence * math.log(confidence)

    kernel = functools.partial(
        _label_smoothing_kernel,
        n=int(n), v=int(v), v_tile=int(v_tile), num_v_tiles=int(num_v_tiles),
        padding_idx=int(padding_idx), eps=eps, confidence=confidence,
        row_const=float(row_const))

    if vmem_limit_bytes is None:
        needed = (2 * row_tile * v_tile * itemsize     # double-buffered x tiles
                  + 2 * row_tile * 128 * 4             # target tiles (lane-padded)
                  + 2 * 8 * 128 * 4)                   # output slabs
        vmem_limit_bytes = min(max(needed + (8 << 20), 32 << 20),
                               max(vmem_cap - (8 << 20), needed + (2 << 20)))

    partials = pl.pallas_call(
        kernel,
        out_shape=jax.ShapeDtypeStruct((num_row_tiles * 8, 128), jnp.float32),
        grid_spec=pltpu.PrefetchScalarGridSpec(
            num_scalar_prefetch=0,
            grid=(num_row_tiles, num_v_tiles),
            in_specs=[
                pl.BlockSpec((row_tile, v_tile), lambda i, j: (i, j)),
                pl.BlockSpec((row_tile, 1), lambda i, j: (i, 0)),
            ],
            out_specs=pl.BlockSpec((8, 128), lambda i, j: (i, 0)),
        ),
        compiler_params=pltpu.CompilerParams(
            dimension_semantics=("parallel", "arbitrary"),
            vmem_limit_bytes=int(vmem_limit_bytes)),
    )(x, tgt2d)

    # reduction='batchmean' -> divide by the original batch size (first dim of x).
    return jnp.sum(partials) / jnp.float32(n)


def _reference_loss(x, target, *, size, padding_idx, smoothing):
    n, v = x.shape
    eps = smoothing / (size - 2)
    confidence = 1.0 - smoothing
    col = jnp.arange(v)[None, :]
    td = jnp.full((n, v), eps, dtype=jnp.float32)
    td = jnp.where(col == target[:, None], confidence, td)
    td = jnp.where(col == padding_idx, 0.0, td)
    td = jnp.where(target[:, None] == padding_idx, 0.0, td)
    contrib = jnp.where(td > 0, td * (jnp.log(jnp.where(td > 0, td, 1.0)) - x), 0.0)
    return jnp.sum(contrib) / n


if __name__ == "__main__":
    PADDING_IDX = 0

    # Case 1: small vocab, f32, plus the smoothing=0.0 / 1.0 trace-time branches.
    SIZE, N = 16, 16
    key = jax.random.PRNGKey(0)
    k1, k2, k3, k4, k5, k6 = jax.random.split(key, 6)
    x1 = jax.nn.log_softmax(jax.random.normal(k1, (N, SIZE), jnp.float32), axis=-1)
    t1 = jax.random.randint(k2, (N,), 0, SIZE, dtype=jnp.int32)
    t1 = t1.at[0].set(PADDING_IDX).at[5].set(PADDING_IDX)
    for sm in (0.1, 0.0, 1.0):
        got = jax.block_until_ready(label_smoothing_loss(
            x1, t1, size=SIZE, padding_idx=PADDING_IDX, smoothing=sm))
        ref = _reference_loss(x1, t1, size=SIZE, padding_idx=PADDING_IDX, smoothing=sm)
        assert jnp.allclose(got, ref, rtol=2e-4, atol=2e-4), (sm, got, ref)

    # Case 2: ragged N (in-kernel tail-row mask, no jnp.pad), multi-row-tile grid,
    # vocab not a multiple of 128 handled as a full-width block.
    N2, V2 = 40, 144
    x2 = jax.nn.log_softmax(jax.random.normal(k3, (N2, V2), jnp.float32), axis=-1)
    t2 = jax.random.randint(k4, (N2,), 0, V2, dtype=jnp.int32).at[3].set(PADDING_IDX)
    got2 = jax.block_until_ready(label_smoothing_loss(
        x2, t2, size=V2, padding_idx=PADDING_IDX, smoothing=0.1, row_tile=16))
    ref2 = _reference_loss(x2, t2, size=V2, padding_idx=PADDING_IDX, smoothing=0.1)
    assert jnp.allclose(got2, ref2, rtol=2e-4, atol=2e-4), (got2, ref2)

    # Case 3: bf16 input streamed natively, forced vocab tiling (v_tile=128) with a
    # ragged last V tile, ragged N, and partial accumulation across vocab tiles.
    N3, V3 = 24, 400
    x3 = jax.nn.log_softmax(jax.random.normal(k5, (N3, V3), jnp.float32), axis=-1)
    x3 = x3.astype(jnp.bfloat16)
    t3 = jax.random.randint(k6, (N3,), 0, V3, dtype=jnp.int32).at[2].set(PADDING_IDX)
    got3 = jax.block_until_ready(label_smoothing_loss(
        x3, t3, size=V3, padding_idx=PADDING_IDX, smoothing=0.1,
        row_tile=16, v_tile=128))
    ref3 = _reference_loss(x3.astype(jnp.float32), t3, size=V3,
                           padding_idx=PADDING_IDX, smoothing=0.1)
    assert jnp.allclose(got3, ref3, rtol=2e-3, atol=2e-3), (got3, ref3)

    print("KERNEL_OK")
</pallas_src>

<mosaic_0001>
module attributes {stable_mosaic.version = 11 : i64} {
  func.func @_label_smoothing_kernel(%arg0: i32, %arg1: i32, %arg2: memref<8x16xf32, #tpu.memory_space<vmem>>, %arg3: memref<8x1xi32, #tpu.memory_space<vmem>>, %arg4: memref<8x128xf32, #tpu.memory_space<vmem>>) attributes {dimension_semantics = [#tpu.dimension_semantics<parallel>, #tpu.dimension_semantics<arbitrary>], iteration_bounds = array<i64: 2, 1>, scalar_prefetch = 0 : i64, scratch_operands = 0 : i64, tpu.core_type = #tpu.core_type<tc>, window_params = [{transform_indices = @transform_0, window_bounds = array<i64: 8, 16>}, {transform_indices = @transform_1, window_bounds = array<i64: 8, 1>}, {transform_indices = @transform_2, window_bounds = array<i64: 8, 128>}]} {
    %c0 = arith.constant 0 : index
    %c0_0 = arith.constant 0 : index
    %0 = vector.load %arg2[%c0, %c0_0] : memref<8x16xf32, #tpu.memory_space<vmem>>, vector<8x16xf32>
    %c0_1 = arith.constant 0 : index
    %c0_2 = arith.constant 0 : index
    %1 = vector.load %arg3[%c0_1, %c0_2] : memref<8x1xi32, #tpu.memory_space<vmem>>, vector<8x1xi32>
    %2 = tpu.iota {dimensions = array<i32: 1>} : vector<8x16xi32>
    %3 = vector.broadcast %1 : vector<8x1xi32> to vector<8x16xi32>
    %4 = arith.cmpi eq, %2, %3 : vector<8x16xi32>
    %cst = arith.constant 0.000000e+00 : f32
    %5 = vector.broadcast %cst : f32 to vector<8x16xf32>
    %6 = arith.select %4, %0, %5 : vector<8x16xi1>, vector<8x16xf32>
    %cst_3 = arith.constant dense<0.000000e+00> : vector<8xf32>
    %7 = vector.multi_reduction <add>, %6, %cst_3 [1] : vector<8x16xf32> to vector<8xf32>
    %8 = vector.shape_cast %7 : vector<8xf32> to vector<8x1xf32>
    %cst_4 = arith.constant 0.000000e+00 : f32
    %9 = vector.broadcast %cst_4 : f32 to vector<8x1xf32>
    %cst_5 = arith.constant dense<0.000000e+00> : vector<8xf32>
    %10 = vector.multi_reduction <add>, %0, %cst_5 [1] : vector<8x16xf32> to vector<8xf32>
    %11 = vector.shape_cast %10 : vector<8xf32> to vector<8x1xf32>
    %12 = vector.extract_strided_slice %0 {offsets = [0, 0], sizes = [8, 1], strides = [1, 1]} : vector<8x16xf32> to vector<8x1xf32>
    %13 = arith.subf %11, %12 : vector<8x1xf32>
    %14 = arith.subf %13, %8 : vector<8x1xf32>
    %cst_6 = arith.constant 0.00714285718 : f32
    %15 = vector.broadcast %cst_6 : f32 to vector<8x1xf32>
    %16 = arith.mulf %15, %14 : vector<8x1xf32>
    %17 = arith.subf %9, %16 : vector<8x1xf32>
    %cst_7 = arith.constant 0.899999976 : f32
    %18 = vector.broadcast %cst_7 : f32 to vector<8x1xf32>
    %19 = arith.mulf %18, %8 : vector<8x1xf32>
    %20 = arith.subf %17, %19 : vector<8x1xf32>
    %cst_8 = arith.constant -0.588988721 : f32
    %21 = vector.broadcast %cst_8 : f32 to vector<8x1xf32>
    %22 = arith.addf %20, %21 : vector<8x1xf32>
    %c0_i32 = arith.constant 0 : i32
    %23 = vector.broadcast %c0_i32 : i32 to vector<8x1xi32>
    %24 = arith.cmpi ne, %1, %23 : vector<8x1xi32>
    %cst_9 = arith.constant 0.000000e+00 : f32
    %25 = vector.broadcast %cst_9 : f32 to vector<8x1xf32>
    %26 = arith.select %24, %22, %25 : vector<8x1xi1>, vector<8x1xf32>
    %27 = vector.shape_cast %26 : vector<8x1xf32> to vector<1x8x1xf32>
    %cst_10 = arith.constant dense<0.000000e+00> : vector<1xf32>
    %28 = vector.multi_reduction <add>, %27, %cst_10 [1, 2] : vector<1x8x1xf32> to vector<1xf32>
    %29 = vector.shape_cast %28 : vector<1xf32> to vector<1x1x1xf32>
    %30 = vector.extract %29[0, 0, 0] : f32 from vector<1x1x1xf32>
    %31 = tpu.iota {dimensions = array<i32: 0>} : vector<8x128xi32>
    %32 = tpu.iota {dimensions = array<i32: 1>} : vector<8x128xi32>
    %c0_i32_11 = arith.constant 0 : i32
    %33 = vector.broadcast %c0_i32_11 : i32 to vector<8x128xi32>
    %34 = arith.cmpi eq, %31, %33 : vector<8x128xi32>
    %c0_i32_12 = arith.constant 0 : i32
    %35 = vector.broadcast %c0_i32_12 : i32 to vector<8x128xi32>
    %36 = arith.cmpi eq, %32, %35 : vector<8x128xi32>
    %37 = arith.andi %34, %36 : vector<8x128xi1>
    %cst_13 = arith.constant 0.000000e+00 : f32
    %38 = vector.broadcast %30 : f32 to vector<8x128xf32>
    %39 = vector.broadcast %cst_13 : f32 to vector<8x128xf32>
    %40 = arith.select %37, %38, %39 : vector<8x128xi1>, vector<8x128xf32>
    %c0_14 = arith.constant 0 : index
    %c0_15 = arith.constant 0 : index
    %41 = vector.load %arg4[%c0_14, %c0_15] : memref<8x128xf32, #tpu.memory_space<vmem>>, vector<8x128xf32>
    tpu.vector_store %arg4[%c0_14, %c0_15], %40 {strides = array<i32>} : memref<8x128xf32, #tpu.memory_space<vmem>>, vector<8x128xf32>,
    return
  }
  func.func @transform_0(%arg0: i32, %arg1: i32) -> (i32, i32) {
    %c0_i32 = arith.constant 0 : i32
    return %arg0, %arg1 : i32, i32
  }
  func.func @transform_1(%arg0: i32, %arg1: i32) -> (i32, i32) {
    %c0_i32 = arith.constant 0 : i32
    %c0_i32_0 = arith.constant 0 : i32
    return %arg0, %c0_i32 : i32, i32
  }
  func.func @transform_2(%arg0: i32, %arg1: i32) -> (i32, i32) {
    %c0_i32 = arith.constant 0 : i32
    %c0_i32_0 = arith.constant 0 : i32
    return %arg0, %c0_i32 : i32, i32
  }
}

</mosaic_0001>

<llo_original>
// kernel: tpu_custom_call.1
$region0: #{tpu_custom_call.1}
  #allocation0 [shape = 'u32[]', space=smem, size = 0x4, offset = 0x4, fixed_abs, tag = 'smem constant byte address 0x4 - core index']
  #allocation1 [shape = 'u32[144,128]{1,0:T(1,128)}', space=vmem, size = 0x12000, scoped, tag = 'internal scratch']
  %s0 = inlined_call_operand.vmem [shape: f32[16,16], index: 0, kind: input, shape index: {}]
  %s1 = inlined_call_operand.vmem [shape: s32[16,1], index: 1, kind: input, shape index: {}]
  %s2 = inlined_call_operand.hbm [shape: f32[16,128], index: 2, kind: output, shape index: {}]
  %s3 = sld [smem:[#allocation0]]
  $region41: #{tpu_custom_call.1} parent=0
    _
  %s5 = ssub.s32 1, %s3
  %s6 = scalar_select 0, %s5, %s3
  $region1: #{tpu_custom_call.1} parent=0
    #allocation2 [shape = 'u8[8192]{0}', space=vmem, size = 0x2000, scoped, tag = 'output window, operand 0']
    #allocation3 [shape = 's32[2]{0}', space=sflag, size = 0x8, scoped, tag = 'scoped memory for tpu_custom_call.1']
    %7 = vsyncpa [#allocation3], 0
    %s8 = scalar_lea.sflag [#allocation3], 1
    %9 = vsyncpa %s8, 0
    loop: start=0, step=1, limit=4
    $region2: #{tpu_custom_call.1} parent=1 // loop_pre_header
      _
    $region3: #{tpu_custom_call.1} parent=1 // loop_header
      %s11 = sphi 0, %s15
      %p12 = scmp.ge.s32.totalorder %s11, 4
      %s18 = sphi 0, %s30
      %s19 = sphi 0, %s26
      %s20 = sphi 0, %s18
      %s21 = sphi 0, %s19
      %s22 = sphi 0, %s20
      %s23 = sphi 0, %s21
      %s35 = sphi 0, %s37
      %s38 = sphi 0, %s35
      %s39 = sphi 0, %s38
      %s55 = sphi 0, %s39
      %s61 = sphi 0, %s63
      %s64 = sphi 0, %s61
      %s65 = sphi 0, %s64
      %s81 = sphi 0, %s65
      %s87 = sphi 0, %s89
      %s90 = sphi 0, %s87
      %s91 = sphi 0, %s90
      %s107 = sphi 0, %s91
    $region4: #{tpu_custom_call.1} parent=1 // loop_header_branch
      %14 = sbr.rel (%p12) target = $region8
    $region5: #{tpu_custom_call.1} parent=1 // loop_body
      %s16 = ssub.s32 %s11, 1
      %s17 = ssub.s32 %s11, 2
      %s24 = sadd.s32 1, %s19
      %p25 = scmp.ge.s32.totalorder %s24, 1
      %s26 = scalar_select %p25, 0, %s24
      %s27 = sadd.s32 1, %s18
      %s28 = scalar_select %p25, %s27, %s18
      %p29 = scmp.ge.s32.totalorder %s28, 2
      %s30 = scalar_select %p29, 0, %s28
      %s31 = ssub.s32 %s18, %s30
      %s32 = ssub.s32 %s19, %s26
      %s33 = sor.u32 %s31, %s32
      %p34 = scmp.eq.s32.totalorder %s33, 0
      %s36 = sadd.s32 %s35, 1
      %s37 = scalar_select %p34, %s35, %s36
      %p40 = pneg %p34
      %p41 = scmp.eq.s32.totalorder %s11, 1
      %p42 = por %p40, %p41
      %p43 = scmp.ne.s32.totalorder %s35, %s38
      %p44 = scmp.eq.s32.totalorder %s11, 0
      %p45 = por %p43, %p44
      %p46 = scmp.ne.s32.totalorder %s35, %s38
      %p47 = scmp.eq.s32.totalorder %s16, 1
      %p48 = por %p46, %p47
      %p49 = scmp.ne.s32.totalorder %s38, %s39
      %p50 = scmp.eq.s32.totalorder %s16, 0
      %p51 = por %p49, %p50
      %p52 = scmp.ne.s32.totalorder %s38, %s39
      %p53 = scmp.eq.s32.totalorder %s17, 1
      %p54 = por %p52, %p53
      %p56 = scmp.ne.s32.totalorder %s39, %s55
      %p57 = scmp.eq.s32.totalorder %s17, 0
      %p58 = por %p56, %p57
      %s59 = ssub.s32 %s18, %s30
      %p60 = scmp.eq.s32.totalorder %s59, 0
      %s62 = sadd.s32 %s61, 1
      %s63 = scalar_select %p60, %s61, %s62
      %p66 = pneg %p60
      %p67 = scmp.eq.s32.totalorder %s11, 1
      %p68 = por %p66, %p67
      %p69 = scmp.ne.s32.totalorder %s61, %s64
      %p70 = scmp.eq.s32.totalorder %s11, 0
      %p71 = por %p69, %p70
      %p72 = scmp.ne.s32.totalorder %s61, %s64
      %p73 = scmp.eq.s32.totalorder %s16, 1
      %p74 = por %p72, %p73
      %p75 = scmp.ne.s32.totalorder %s64, %s65
      %p76 = scmp.eq.s32.totalorder %s16, 0
      %p77 = por %p75, %p76
      %p78 = scmp.ne.s32.totalorder %s64, %s65
      %p79 = scmp.eq.s32.totalorder %s17, 1
      %p80 = por %p78, %p79
      %p82 = scmp.ne.s32.totalorder %s65, %s81
      %p83 = scmp.eq.s32.totalorder %s17, 0
      %p84 = por %p82, %p83
      %s85 = ssub.s32 %s18, %s30
      %p86 = scmp.eq.s32.totalorder %s85, 0
      %s88 = sadd.s32 %s87, 1
      %s89 = scalar_select %p86, %s87, %s88
      %p92 = pneg %p86
      %p93 = scmp.eq.s32.totalorder %s11, 1
      %p94 = por %p92, %p93
      %p95 = scmp.ne.s32.totalorder %s87, %s90
      %p96 = scmp.eq.s32.totalorder %s11, 0
      %p97 = por %p95, %p96
      %p98 = scmp.ne.s32.totalorder %s87, %s90
      %p99 = scmp.eq.s32.totalorder %s16, 1
      %p100 = por %p98, %p99
      %p101 = scmp.ne.s32.totalorder %s90, %s91
      %p102 = scmp.eq.s32.totalorder %s16, 0
      %p103 = por %p101, %p102
      %p104 = scmp.ne.s32.totalorder %s90, %s91
      %p105 = scmp.eq.s32.totalorder %s17, 1
      %p106 = por %p104, %p105
      %p108 = scmp.ne.s32.totalorder %s91, %s107
      %p109 = scmp.eq.s32.totalorder %s17, 0
      %p110 = por %p108, %p109
      %p111 = scmp.le.s32.totalorder 1, %s11
      %p112 = scmp.lt.s32.totalorder %s11, 3
      %p113 = pnand %p111, %p112
      %p114 = pneg %p113
      // Predicated region
      $region9: #{tpu_custom_call.1} parent=5 // pred_check
        _
      $region10: #{tpu_custom_call.1} parent=5 // pred_check_branch
        %116 = sbr.rel (%p113) target = $region12
      $region11: #{tpu_custom_call.1} parent=5 // pred_region
        %s117 = ssub.s32 %s11, 1
      $region12: #{tpu_custom_call.1} parent=5 // pred_fallthru
        _
      %p118 = scmp.lt.s32.totalorder %s11, 2
      // Predicated region
      $region13: #{tpu_custom_call.1} parent=5 // pred_check
        %p119 = pneg %p118
      $region14: #{tpu_custom_call.1} parent=5 // pred_check_branch
        %121 = sbr.rel (%p119) target = $region16
      $region15: #{tpu_custom_call.1} parent=5 // pred_region
        // Predicated region
        $region17: #{tpu_custom_call.1} parent=15 // pred_check
          %p122 = pneg %p45
        $region18: #{tpu_custom_call.1} parent=15 // pred_check_branch
          %124 = sbr.rel (%p122) target = $region20
        $region19: #{tpu_custom_call.1} parent=15 // pred_region
          %p125 = scmp.lt.s32.totalorder %s18, 1
          %s126 = scalar_select %p125, %s18, 1
          %p127 = scmp.lt.s32.totalorder %s19, 0
          %s128 = scalar_select %p127, %s19, 0
          %s129 = sadd.s32 %s128, %s126
          %s130 = smul.addr %s129, 8
          %s131 = scalar_lea.vmem %s0, %s130
        $region20: #{tpu_custom_call.1} parent=15 // pred_fallthru
          _
        // Predicated region
        $region21: #{tpu_custom_call.1} parent=15 // pred_check
          %p132 = pneg %p71
        $region22: #{tpu_custom_call.1} parent=15 // pred_check_branch
          %134 = sbr.rel (%p132) target = $region24
        $region23: #{tpu_custom_call.1} parent=15 // pred_region
          %p135 = scmp.lt.s32.totalorder %s18, 1
          %s136 = scalar_select %p135, %s18, 1
          %s137 = smul.addr %s136, 8
          %s138 = scalar_lea.vmem %s1, %s137
        $region24: #{tpu_custom_call.1} parent=15 // pred_fallthru
          _
      $region16: #{tpu_custom_call.1} parent=5 // pred_fallthru
        _
      %p139 = scmp.le.s32.totalorder 1, %s11
      %p140 = scmp.lt.s32.totalorder %s11, 3
      %p141 = pnand %p139, %p140
      %p142 = pneg %p141
      // Predicated region
      $region25: #{tpu_custom_call.1} parent=5 // pred_check
        _
      $region26: #{tpu_custom_call.1} parent=5 // pred_check_branch
        %144 = sbr.rel (%p141) target = $region28
      $region27: #{tpu_custom_call.1} parent=5 // pred_region
        %s145 = ssub.s32 %s11, 1
        %p146 = scmp.lt.s32.totalorder %s20, 1
        %s147 = scalar_select %p146, %s20, 1
        %p148 = scmp.lt.s32.totalorder %s21, 0
        %s149 = scalar_select %p148, %s21, 0
        %s150 = sadd.s32 %s149, %s147
        %s151 = smul.addr %s150, 8
        %s152 = scalar_lea.vmem %s0, %s151
        %p153 = pneg %p51
        %p154 = pneg %p48
        %p155 = scmp.lt.s32.totalorder %s20, 1
        %s156 = scalar_select %p155, %s20, 1
        %s157 = smul.addr %s156, 8
        %s158 = scalar_lea.vmem %s1, %s157
        %p159 = pneg %p77
        %p160 = pneg %p74
        %p161 = pneg %p103
        %p162 = pneg %p100
        %s163 = sand.u32 %s90, 1
        %s164 = scalar_lea.sflag [#allocation3], %s163
        %s165 = sand.u32 %s90, 1
        %s166 = smul.addr %s165, 8
        %s167 = scalar_lea.vmem [#allocation2], %s166
        %p168 = scmp.lt.s32.totalorder %s20, 1
        %s169 = scalar_select %p168, %s20, 1
        %p170 = scmp.lt.s32.totalorder %s21, 0
        %s171 = scalar_select %p170, %s21, 0
        %s172 = sadd.s32 %s171, %s169
        %s173 = smul.addr %s172, 8
        %s174 = scalar_lea.vmem %s0, %s173
        %p175 = scmp.lt.s32.totalorder %s20, 1
        %s176 = scalar_select %p175, %s20, 1
        %s177 = smul.addr %s176, 8
        %s178 = scalar_lea.vmem %s1, %s177
        %v179 = vld [vmem:[%s174] sm:$0xff]
        %v180 = vld [vmem:[%s178] sm:$0xff]
        %v181 = vlaneseq
        %v182 = vand.u32 %v181, 127
        %183 = vset.pattern.permute.xlu0 0
        %184 = vperm.xlu0 %183, %v180
        %v185 = vpop.permute.xlu0 %184
        %vm186 = vcmp.eq.s32.totalorder %v182, %v185
        %v187 = vsel %vm186, %v179, 0.0
        %vm188 = vcmask 130048
        %v189 = vsel %vm188, %v187, 0.0
        %190 = vadd.xlane.f32.xlu0 %v189
        %v191 = vpop.xlane.xlu0 %190
        %v192 = vsel %vm188, %v179, 0.0
        %193 = vadd.xlane.f32.xlu0 %v192
        %v194 = vpop.xlane.xlu0 %193
        %v195 = vsub.f32 %v194, %v179
        %v196 = vsub.f32 %v195, %v191
        %v197 = vmul.f32 %v196, 0.007142857
        %v198 = vsub.f32 0.0, %v197
        %v199 = vmul.f32 %v191, 0.9
        %v200 = vsub.f32 %v198, %v199
        %v201 = vadd.f32 %v200, -0.5889887
        %vm202 = vcmp.ne.s32.totalorder %v180, 0
        %v203 = vsel %vm202, %v201, 0.0
        %vm204 = vcmask 7168
        %v205 = vsel %vm204, %v203, 0.0
        %206 = vadd.xlane.f32.xlu0 %v205
        %v207 = vpop.xlane.xlu0 %206
        %v208 = vrot.slane %v207, 4
        %v209 = vadd.f32 %v207, %v208
        %v210 = vrot.slane %v209, 2
        %v211 = vadd.f32 %v209, %v210
        %v212 = vrot.slane %v211, 1
        %v213 = vadd.f32 %v211, %v212
        %s214 = vtos %v213
        %v215 = vlaneseq
        %v216 = vshrl.u32 %v215, 7
        %vm217 = vcmp.eq.s32.totalorder %v216, 0
        %vm218 = vcmp.eq.s32.totalorder %v182, 0
        %vm219 = vmand %vm217, %vm218
        %v220 = vstv %s214
        %v221 = vsel %vm219, %v220, 0.0
        %222 = vst [vmem:[%s167] sm:$0xff] %v221
        %s223 = sand.u32 %s90, 1
        %s224 = scalar_lea.sflag [#allocation3], %s223
        %s225 = sand.u32 %s90, 1
        %s226 = smul.addr %s225, 8
        %s227 = scalar_lea.vmem [#allocation2], %s226
        // Predicated region
        $region29: #{tpu_custom_call.1} parent=27 // pred_check
          %p228 = pneg %p100
        $region30: #{tpu_custom_call.1} parent=27 // pred_check_branch
          %230 = sbr.rel (%p228) target = $region32
        $region31: #{tpu_custom_call.1} parent=27 // pred_region
          %s232 = ssub.s32 128, 128
          %233 = vsyncadd %s224, %s232
          %s234 = smul.addr %s20, 128
          %s235 = scalar_lea.hbm %s2, %s234
          %s237 = sshll.u32 %s227, 4
          %s238 = int_to_ptr.vmem [resolvable:$true] %s237
          %240 = dma.vmem_to_hbm [thread:$0]  %s238, 128, %s235, %s224
        $region32: #{tpu_custom_call.1} parent=27 // pred_fallthru
          _
      $region28: #{tpu_custom_call.1} parent=5 // pred_fallthru
        _
      %p241 = scmp.le.s32.totalorder 2, %s11
      // Predicated region
      $region33: #{tpu_custom_call.1} parent=5 // pred_check
        %p242 = pneg %p241
      $region34: #{tpu_custom_call.1} parent=5 // pred_check_branch
        %244 = sbr.rel (%p242) target = $region36
      $region35: #{tpu_custom_call.1} parent=5 // pred_region
        %s245 = ssub.s32 %s11, 2
        // Predicated region
        $region37: #{tpu_custom_call.1} parent=35 // pred_check
          %p246 = pneg %p106
        $region38: #{tpu_custom_call.1} parent=35 // pred_check_branch
          %248 = sbr.rel (%p246) target = $region40
        $region39: #{tpu_custom_call.1} parent=35 // pred_region
          %s249 = sand.u32 %s91, 1
          %s250 = scalar_lea.sflag [#allocation3], %s249
          %s251 = sand.u32 %s91, 1
          %s252 = smul.addr %s251, 8
          %s253 = scalar_lea.vmem [#allocation2], %s252
          %254 = dma.done %s250, 128
        $region40: #{tpu_custom_call.1} parent=35 // pred_fallthru
          _
      $region36: #{tpu_custom_call.1} parent=5 // pred_fallthru
        _
    $region6: #{tpu_custom_call.1} parent=1 // loop_footer
      %s15 = sadd.s32 1, %s11
    $region7: #{tpu_custom_call.1} parent=1 // loop_footer_branch
      %10 = sbr.rel target = $region3
    $region8: #{tpu_custom_call.1} parent=1 // loop_exit
      _
    %255 = vsyncpa [#allocation3], 1
    %s256 = scalar_lea.sflag [#allocation3], 1
    %257 = vsyncpa %s256, 1

</llo_original>
